<compile_context>
chip_gen: v7x
topology: tpu7x:2x2x1
jax: 0.10.0
libtpu: 0.0.40
codegen_flags: <defaults>
</compile_context>

<pallas_src>
import functools

import jax
import jax.numpy as jnp
from jax.experimental import pallas as pl
from jax.experimental.pallas import tpu as pltpu


def _label_smoothing_kernel(pred_ref, tgt_ref, out_ref, acc_ref, *,
                            confidence, smooth_off, num_class, total_rows,
                            tile_n, steps_per_core):
    c = pl.program_id(0)          # core / batch-half axis ("parallel")
    i = pl.program_id(1)          # batch-tile axis ("arbitrary")

    @pl.when(i == 0)
    def _():
        acc_ref[...] = jnp.zeros_like(acc_ref)

    x = pred_ref[...].astype(jnp.float32)          # (tile_n, C)
    tgt = tgt_ref[...]                             # (tile_n, 1) int32

    # log_softmax pieces along the class (lane) axis.
    m = jnp.max(x, axis=-1, keepdims=True)
    shifted = x - m
    lse = jnp.log(jnp.sum(jnp.exp(shifted), axis=-1, keepdims=True))

    # Smoothed cross entropy without materializing true_dist:
    #   sum_c -true_dist*logp = -(conf-off)*logp[t] - off*sum_c logp
    #   logp[t]    = shifted[t] - lse
    #   sum_c logp = sum_c shifted - C*lse
    col = jax.lax.broadcasted_iota(jnp.int32, x.shape, 1)
    shift_t = jnp.sum(jnp.where(col == tgt, shifted, 0.0),
                      axis=-1, keepdims=True)
    s_sum = jnp.sum(shifted, axis=-1, keepdims=True)

    row_loss = (-(confidence - smooth_off) * (shift_t - lse)
                - smooth_off * (s_sum - jnp.float32(num_class) * lse))

    # Mask rows outside the real batch (partial last tile and clamped
    # duplicate blocks on the parallel core axis contribute 0).
    base = (c * steps_per_core + i) * tile_n
    row = base + jax.lax.broadcasted_iota(jnp.int32, row_loss.shape, 0)
    row_loss = jnp.where(row < total_rows, row_loss, 0.0)

    acc_ref[...] += jnp.sum(row_loss, axis=(0, 1), keepdims=True)

    @pl.when(i == pl.num_programs(1) - 1)
    def _():
        out_ref[...] = jnp.broadcast_to(acc_ref[...].reshape(1, 1, 1),
                                        out_ref.shape)


def _choose_tile_n(n_rows, num_class, *, target_block_bytes=4 << 20,
                   max_rows=4096):
    """Pick a batch tile: ~target_block_bytes of logits, multiple of 8 rows."""
    rows = max(8, target_block_bytes // (4 * num_class))
    rows = min(rows, max_rows)
    if rows >= n_rows:
        return n_rows                      # single full-extent block
    return max(8, (rows // 8) * 8)


def label_smoothing_loss(pred, target, num_class, smoothing=0.0, *,
                         tile_n=None, num_cores=2,
                         vmem_limit_bytes=48 * 1024 * 1024):
    """pred: (N, C) float32/bfloat16 logits, target: (N,) int labels -> scalar."""
    N, C = pred.shape
    assert C == num_class
    confidence = 1.0 - smoothing
    smooth_off = (smoothing / (num_class - 1)) if num_class > 1 else 0.0
    tgt2d = target.astype(jnp.int32).reshape(N, 1)

    if tile_n is None:
        tile_n = _choose_tile_n(N, C)
    nblocks = pl.cdiv(N, tile_n)
    num_cores = max(1, min(num_cores, nblocks))
    steps = pl.cdiv(nblocks, num_cores)

    def block_map(c, i):
        # Clamp to the last real block; out-of-range work is masked in-kernel.
        b = jnp.minimum(c * steps + i, nblocks - 1)
        return (b, 0)

    kernel = functools.partial(
        _label_smoothing_kernel,
        confidence=confidence, smooth_off=smooth_off, num_class=C,
        total_rows=N, tile_n=tile_n, steps_per_core=steps)

    out = pl.pallas_call(
        kernel,
        out_shape=jax.ShapeDtypeStruct((num_cores, 8, 128), jnp.float32),
        grid_spec=pltpu.PrefetchScalarGridSpec(
            num_scalar_prefetch=0,
            grid=(num_cores, steps),
            in_specs=[
                pl.BlockSpec((tile_n, C), block_map),
                pl.BlockSpec((tile_n, 1), block_map),
            ],
            out_specs=pl.BlockSpec((1, 8, 128), lambda c, i: (c, 0, 0)),
            scratch_shapes=[pltpu.VMEM((1, 1), jnp.float32)],
        ),
        compiler_params=pltpu.CompilerParams(
            dimension_semantics=("parallel", "arbitrary"),
            vmem_limit_bytes=vmem_limit_bytes),
    )(pred, tgt2d)

    # Combine per-core partial sums and take the batch mean.
    return jnp.sum(out[:, 0, 0]) / jnp.float32(N)


def _reference(pred, target, num_class, smoothing):
    logp = jax.nn.log_softmax(pred, axis=-1)
    confidence = 1.0 - smoothing
    true_dist = jnp.full_like(logp, smoothing / (num_class - 1))
    true_dist = true_dist.at[jnp.arange(pred.shape[0]), target].set(confidence)
    return jnp.mean(jnp.sum(-true_dist * logp, axis=-1))


if __name__ == "__main__":
    N, C = 20, 32
    smoothing = 0.1

    key = jax.random.PRNGKey(0)
    kp, kt = jax.random.split(key)
    pred = jax.random.normal(kp, (N, C), dtype=jnp.float32)
    target = jax.random.randint(kt, (N,), 0, C, dtype=jnp.int32)

    ref = _reference(pred, target, C, smoothing)

    # Default path: single full-extent block, one core.
    loss = jax.block_until_ready(
        label_smoothing_loss(pred, target, C, smoothing))
    assert jnp.allclose(loss, ref, atol=1e-5, rtol=1e-5), (loss, ref)

    # Tiled path: 2-core parallel axis, uneven block split, masked partial
    # last tile (N=20, tile_n=8 -> 3 real blocks across 2 cores).
    loss2 = jax.block_until_ready(
        label_smoothing_loss(pred, target, C, smoothing, tile_n=8, num_cores=2))
    assert jnp.allclose(loss2, ref, atol=1e-5, rtol=1e-5), (loss2, ref)

    print("KERNEL_OK")
</pallas_src>

<mosaic_0001>
module attributes {stable_mosaic.version = 11 : i64} {
  func.func @_label_smoothing_kernel(%arg0: i32, %arg1: i32, %arg2: memref<20x32xf32, #tpu.memory_space<vmem>>, %arg3: memref<20x1xi32, #tpu.memory_space<vmem>>, %arg4: memref<1x8x128xf32, #tpu.memory_space<vmem>>, %arg5: memref<1x1xf32, #tpu.memory_space<vmem>>) attributes {dimension_semantics = [#tpu.dimension_semantics<parallel>, #tpu.dimension_semantics<arbitrary>], iteration_bounds = array<i64: 1, 1>, scalar_prefetch = 0 : i64, scratch_operands = 1 : i64, tpu.core_type = #tpu.core_type<tc>, window_params = [{transform_indices = @transform_0, window_bounds = array<i64: 20, 32>}, {transform_indices = @transform_1, window_bounds = array<i64: 20, 1>}, {transform_indices = @transform_2, window_bounds = array<i64: 1, 8, 128>}]} {
    %c0_i32 = arith.constant 0 : i32
    %0 = arith.cmpi eq, %arg1, %c0_i32 : i32
    %1 = arith.extui %0 : i1 to i32
    %c0_i32_0 = arith.constant 0 : i32
    %2 = arith.cmpi ne, %1, %c0_i32_0 : i32
    scf.if %2 {
      %cst_20 = arith.constant 0.000000e+00 : f32
      %52 = vector.broadcast %cst_20 : f32 to vector<1x1xf32>
      %c0_21 = arith.constant 0 : index
      %c0_22 = arith.constant 0 : index
      %53 = vector.load %arg5[%c0_21, %c0_22] : memref<1x1xf32, #tpu.memory_space<vmem>>, vector<1x1xf32>
      tpu.vector_store %arg5[%c0_21, %c0_22], %52 {strides = array<i32>} : memref<1x1xf32, #tpu.memory_space<vmem>>, vector<1x1xf32>,
    } else {
    }
    %c0 = arith.constant 0 : index
    %c0_1 = arith.constant 0 : index
    %3 = vector.load %arg2[%c0, %c0_1] : memref<20x32xf32, #tpu.memory_space<vmem>>, vector<20x32xf32>
    %c0_2 = arith.constant 0 : index
    %c0_3 = arith.constant 0 : index
    %4 = vector.load %arg3[%c0_2, %c0_3] : memref<20x1xi32, #tpu.memory_space<vmem>>, vector<20x1xi32>
    %cst = arith.constant dense<0xFF800000> : vector<20xf32>
    %5 = vector.multi_reduction <maximumf>, %3, %cst [1] : vector<20x32xf32> to vector<20xf32>
    %6 = vector.shape_cast %5 : vector<20xf32> to vector<20x1xf32>
    %7 = vector.broadcast %6 : vector<20x1xf32> to vector<20x32xf32>
    %8 = arith.subf %3, %7 : vector<20x32xf32>
    %9 = math.exp %8 : vector<20x32xf32>
    %cst_4 = arith.constant dense<0.000000e+00> : vector<20xf32>
    %10 = vector.multi_reduction <add>, %9, %cst_4 [1] : vector<20x32xf32> to vector<20xf32>
    %11 = vector.shape_cast %10 : vector<20xf32> to vector<20x1xf32>
    %12 = math.log %11 : vector<20x1xf32>
    %13 = tpu.iota {dimensions = array<i32: 1>} : vector<20x32xi32>
    %14 = vector.broadcast %4 : vector<20x1xi32> to vector<20x32xi32>
    %15 = arith.cmpi eq, %13, %14 : vector<20x32xi32>
    %cst_5 = arith.constant 0.000000e+00 : f32
    %16 = vector.broadcast %cst_5 : f32 to vector<20x32xf32>
    %17 = arith.select %15, %8, %16 : vector<20x32xi1>, vector<20x32xf32>
    %cst_6 = arith.constant dense<0.000000e+00> : vector<20xf32>
    %18 = vector.multi_reduction <add>, %17, %cst_6 [1] : vector<20x32xf32> to vector<20xf32>
    %19 = vector.shape_cast %18 : vector<20xf32> to vector<20x1xf32>
    %cst_7 = arith.constant dense<0.000000e+00> : vector<20xf32>
    %20 = vector.multi_reduction <add>, %8, %cst_7 [1] : vector<20x32xf32> to vector<20xf32>
    %21 = vector.shape_cast %20 : vector<20xf32> to vector<20x1xf32>
    %22 = arith.subf %19, %12 : vector<20x1xf32>
    %cst_8 = arith.constant -0.896774172 : f32
    %23 = vector.broadcast %cst_8 : f32 to vector<20x1xf32>
    %24 = arith.mulf %23, %22 : vector<20x1xf32>
    %cst_9 = arith.constant 3.200000e+01 : f32
    %25 = vector.broadcast %cst_9 : f32 to vector<20x1xf32>
    %26 = arith.mulf %25, %12 : vector<20x1xf32>
    %27 = arith.subf %21, %26 : vector<20x1xf32>
    %cst_10 = arith.constant 0.0032258064 : f32
    %28 = vector.broadcast %cst_10 : f32 to vector<20x1xf32>
    %29 = arith.mulf %28, %27 : vector<20x1xf32>
    %30 = arith.subf %24, %29 : vector<20x1xf32>
    %c1_i32 = arith.constant 1 : i32
    %31 = arith.muli %arg0, %c1_i32 : i32
    %32 = arith.addi %31, %arg1 : i32
    %c20_i32 = arith.constant 20 : i32
    %33 = arith.muli %32, %c20_i32 : i32
    %34 = tpu.iota {dimensions = array<i32: 0>} : vector<20x1xi32>
    %35 = vector.broadcast %33 : i32 to vector<20x1xi32>
    %36 = arith.addi %35, %34 : vector<20x1xi32>
    %c20_i32_11 = arith.constant 20 : i32
    %37 = vector.broadcast %c20_i32_11 : i32 to vector<20x1xi32>
    %38 = arith.cmpi slt, %36, %37 : vector<20x1xi32>
    %cst_12 = arith.constant 0.000000e+00 : f32
    %39 = vector.broadcast %cst_12 : f32 to vector<20x1xf32>
    %40 = arith.select %38, %30, %39 : vector<20x1xi1>, vector<20x1xf32>
    %c0_13 = arith.constant 0 : index
    %c0_14 = arith.constant 0 : index
    %41 = vector.load %arg5[%c0_13, %c0_14] : memref<1x1xf32, #tpu.memory_space<vmem>>, vector<1x1xf32>
    %42 = vector.shape_cast %40 : vector<20x1xf32> to vector<1x20x1xf32>
    %cst_15 = arith.constant dense<0.000000e+00> : vector<1xf32>
    %43 = vector.multi_reduction <add>, %42, %cst_15 [1, 2] : vector<1x20x1xf32> to vector<1xf32>
    %44 = vector.shape_cast %43 : vector<1xf32> to vector<1x1x1xf32>
    %45 = vector.extract %44[0, 0, 0] : f32 from vector<1x1x1xf32>
    %46 = vector.broadcast %45 : f32 to vector<1x1xf32>
    %47 = arith.addf %41, %46 : vector<1x1xf32>
    %c0_16 = arith.constant 0 : index
    %c0_17 = arith.constant 0 : index
    %48 = vector.load %arg5[%c0_16, %c0_17] : memref<1x1xf32, #tpu.memory_space<vmem>>, vector<1x1xf32>
    tpu.vector_store %arg5[%c0_16, %c0_17], %47 {strides = array<i32>} : memref<1x1xf32, #tpu.memory_space<vmem>>, vector<1x1xf32>,
    %c0_i32_18 = arith.constant 0 : i32
    %49 = arith.cmpi eq, %arg1, %c0_i32_18 : i32
    %50 = arith.extui %49 : i1 to i32
    %c0_i32_19 = arith.constant 0 : i32
    %51 = arith.cmpi ne, %50, %c0_i32_19 : i32
    scf.if %51 {
      %c0_20 = arith.constant 0 : index
      %c0_21 = arith.constant 0 : index
      %52 = vector.load %arg5[%c0_20, %c0_21] : memref<1x1xf32, #tpu.memory_space<vmem>>, vector<1x1xf32>
      %53 = vector.shape_cast %52 : vector<1x1xf32> to vector<1x1x1xf32>
      %54 = vector.shape_cast %53 : vector<1x1x1xf32> to vector<1x1x1xf32>
      %55 = vector.broadcast %54 : vector<1x1x1xf32> to vector<1x8x128xf32>
      %c0_22 = arith.constant 0 : index
      %c0_23 = arith.constant 0 : index
      %c0_24 = arith.constant 0 : index
      %56 = vector.load %arg4[%c0_22, %c0_23, %c0_24] : memref<1x8x128xf32, #tpu.memory_space<vmem>>, vector<1x8x128xf32>
      tpu.vector_store %arg4[%c0_22, %c0_23, %c0_24], %55 {strides = array<i32>} : memref<1x8x128xf32, #tpu.memory_space<vmem>>, vector<1x8x128xf32>,
    } else {
    }
    return
  }
  func.func @transform_0(%arg0: i32, %arg1: i32) -> (i32, i32) {
    %c1_i32 = arith.constant 1 : i32
    %0 = arith.muli %arg0, %c1_i32 : i32
    %1 = arith.addi %0, %arg1 : i32
    %c0_i32 = arith.constant 0 : i32
    %2 = arith.minsi %1, %c0_i32 : i32
    %c0_i32_0 = arith.constant 0 : i32
    %c0_i32_1 = arith.constant 0 : i32
    return %2, %c0_i32_0 : i32, i32
  }
  func.func @transform_1(%arg0: i32, %arg1: i32) -> (i32, i32) {
    %c1_i32 = arith.constant 1 : i32
    %0 = arith.muli %arg0, %c1_i32 : i32
    %1 = arith.addi %0, %arg1 : i32
    %c0_i32 = arith.constant 0 : i32
    %2 = arith.minsi %1, %c0_i32 : i32
    %c0_i32_0 = arith.constant 0 : i32
    %c0_i32_1 = arith.constant 0 : i32
    return %2, %c0_i32_0 : i32, i32
  }
  func.func @transform_2(%arg0: i32, %arg1: i32) -> (i32, i32, i32) {
    %c0_i32 = arith.constant 0 : i32
    %c0_i32_0 = arith.constant 0 : i32
    %c0_i32_1 = arith.constant 0 : i32
    return %arg0, %c0_i32, %c0_i32_0 : i32, i32, i32
  }
}

</mosaic_0001>

<llo_original>
// kernel: tpu_custom_call.1
$region0: #{tpu_custom_call.1}
  #allocation0 [shape = 'u32[]', space=smem, size = 0x4, offset = 0x4, fixed_abs, tag = 'smem constant byte address 0x4 - core index']
  #allocation1 [shape = 'u32[144,128]{1,0:T(1,128)}', space=vmem, size = 0x12000, scoped, tag = 'internal scratch']
  #allocation2 [shape = 'f32[1,1]{1,0:T(1,128)}', space=vmem, size = 0x200, scoped, tag = 'scratch operand']
  %s0 = inlined_call_operand.vmem [shape: f32[20,32], index: 0, kind: input, shape index: {}]
  %s1 = inlined_call_operand.vmem [shape: s32[20,1], index: 1, kind: input, shape index: {}]
  %s2 = inlined_call_operand.hbm [shape: f32[1,8,128], index: 2, kind: output, shape index: {}]
  %s3 = sld [smem:[#allocation0]]
  $region26: #{tpu_custom_call.1} parent=0
    _
  %s5 = ssub.s32 1, %s3
  %s6 = scalar_select 0, %s5, %s3
  $region1: #{tpu_custom_call.1} parent=0
    #allocation3 [shape = 'u8[4096]{0}', space=vmem, size = 0x1000, scoped, tag = 'output window, operand 0, single buffered']
    #allocation4 [shape = 's32[1]{0}', space=sflag, size = 0x4, scoped, tag = 'scoped memory for tpu_custom_call.1']
    %7 = vsyncpa [#allocation4], 0
    // Predicated region
    $region2: #{tpu_custom_call.1} parent=1 // pred_check
      _
    $region3: #{tpu_custom_call.1} parent=1 // pred_check_branch
      %9 = sbr.rel (0) target = $region5
    $region4: #{tpu_custom_call.1} parent=1 // pred_region
      %s10 = sadd.s32 0, 0
      %p11 = scmp.lt.s32.totalorder %s10, 0
      %s12 = scalar_select %p11, %s10, 0
      %s13 = smul.u32 3, %s12
      %p14 = scmp.lt.s32.totalorder %s13, 2
      %s15 = scalar_select %p14, %s13, 2
      %s16 = smul.addr %s15, 8
      %s17 = scalar_lea.vmem %s0, %s16
      %s18 = sadd.s32 0, 0
      %p19 = scmp.lt.s32.totalorder %s18, 0
      %s20 = scalar_select %p19, %s18, 0
      %s21 = smul.u32 3, %s20
    $region5: #{tpu_custom_call.1} parent=1 // pred_fallthru
      _
    // Predicated region
    $region6: #{tpu_custom_call.1} parent=1 // pred_check
      _
    $region7: #{tpu_custom_call.1} parent=1 // pred_check_branch
      %23 = sbr.rel (0) target = $region9
    $region8: #{tpu_custom_call.1} parent=1 // pred_region
      %s24 = sadd.s32 0, 0
      %p25 = scmp.lt.s32.totalorder %s24, 0
      %s26 = scalar_select %p25, %s24, 0
      %s27 = smul.u32 3, %s26
      %p28 = scmp.lt.s32.totalorder %s27, 2
      %s29 = scalar_select %p28, %s27, 2
      %s30 = smul.addr %s29, 8
      %s31 = scalar_lea.vmem %s1, %s30
      %s32 = sadd.s32 0, 0
      %p33 = scmp.lt.s32.totalorder %s32, 0
      %s34 = scalar_select %p33, %s32, 0
      %s35 = smul.u32 3, %s34
    $region9: #{tpu_custom_call.1} parent=1 // pred_fallthru
      _
    %s36 = sadd.s32 0, 0
    %p37 = scmp.lt.s32.totalorder %s36, 0
    %s38 = scalar_select %p37, %s36, 0
    %s39 = smul.u32 3, %s38
    %p40 = scmp.lt.s32.totalorder %s39, 2
    %s41 = scalar_select %p40, %s39, 2
    %s42 = smul.addr %s41, 8
    %s43 = scalar_lea.vmem %s0, %s42
    %s44 = sadd.s32 0, 0
    %p45 = scmp.lt.s32.totalorder %s44, 0
    %s46 = scalar_select %p45, %s44, 0
    %s47 = smul.u32 3, %s46
    %p48 = scmp.lt.s32.totalorder %s47, 2
    %s49 = scalar_select %p48, %s47, 2
    %s50 = smul.addr %s49, 8
    %s51 = scalar_lea.vmem %s1, %s50
    %s52 = sadd.s32 0, 0
    %p53 = scmp.lt.s32.totalorder %s52, 0
    %s54 = scalar_select %p53, %s52, 0
    %s55 = smul.u32 3, %s54
    %p56 = scmp.lt.s32.totalorder %s55, 2
    %s57 = scalar_select %p56, %s55, 2
    %s58 = smul.addr %s57, 8
    %s59 = scalar_lea.vmem %s0, %s58
    %s60 = sadd.s32 0, 0
    %p61 = scmp.lt.s32.totalorder %s60, 0
    %s62 = scalar_select %p61, %s60, 0
    %s63 = smul.u32 3, %s62
    %s64 = sadd.s32 0, 0
    %p65 = scmp.lt.s32.totalorder %s64, 0
    %s66 = scalar_select %p65, %s64, 0
    %s67 = smul.u32 3, %s66
    %p68 = scmp.lt.s32.totalorder %s67, 2
    %s69 = scalar_select %p68, %s67, 2
    %s70 = smul.addr %s69, 8
    %s71 = scalar_lea.vmem %s1, %s70
    %s72 = sadd.s32 0, 0
    %p73 = scmp.lt.s32.totalorder %s72, 0
    %s74 = scalar_select %p73, %s72, 0
    %s75 = smul.u32 3, %s74
    %p76 = scmp.eq.s32.totalorder 0, 0
    // Predicated region
    $region10: #{tpu_custom_call.1} parent=1 // pred_check
      %p77 = pneg %p76
    $region11: #{tpu_custom_call.1} parent=1 // pred_check_branch
      %79 = sbr.rel (%p77) target = $region13
    $region12: #{tpu_custom_call.1} parent=1 // pred_region
      %vm80 = vcmask 0
      %81 = vst.msk [vmem:[#allocation2] sm:$0x1] %vm80, 0.0
    $region13: #{tpu_custom_call.1} parent=1 // pred_fallthru
      _
    %v82 = vld [vmem:[%s59] sm:$0xff]
    %v83 = vld [vmem:[%s59 + $0x8] sm:$0xff]
    %v84 = vld [vmem:[%s59 + $0x10] sm:$0xf]
    %v85 = vld [vmem:[%s71] sm:$0xff]
    %v86 = vld [vmem:[%s71 + $0x8] sm:$0xff]
    %v87 = vld [vmem:[%s71 + $0x10] sm:$0xf]
    %vm88 = vcmask 261120
    %v89 = vsel %vm88, %v82, -inf
    %90 = vmax.xlane.f32.xlu0 %v89
    %v91 = vpop.xlane.xlu0 %90
    %v92 = vsel %vm88, %v83, -inf
    %93 = vmax.xlane.f32.xlu0 %v92
    %v94 = vpop.xlane.xlu0 %93
    %vm95 = vcmask 257024
    %v96 = vsel %vm95, %v84, -inf
    %97 = vmax.xlane.f32.xlu0 %v96
    %v98 = vpop.xlane.xlu0 %97
    %v99 = vsub.f32 %v82, %v91
    %v100 = vsub.f32 %v83, %v94
    %v101 = vsub.f32 %v84, %v98
    %v102 = vmul.f32 %v99, 1.442695
    %v103 = vpow.pop %v102
    %v104 = vmul.f32 %v100, 1.442695
    %v105 = vpow.pop %v104
    %v106 = vmul.f32 %v101, 1.442695
    %v107 = vpow.pop %v106
    %v108 = vsel %vm88, %v103, 0.0
    %109 = vadd.xlane.f32.xlu0 %v108
    %v110 = vpop.xlane.xlu0 %109
    %v111 = vsel %vm88, %v105, 0.0
    %112 = vadd.xlane.f32.xlu0 %v111
    %v113 = vpop.xlane.xlu0 %112
    %v114 = vsel %vm95, %v107, 0.0
    %115 = vadd.xlane.f32.xlu0 %v114
    %v116 = vpop.xlane.xlu0 %115
    %v117 = vlog2.pop %v110
    %v118 = vmul.f32 %v117, 0.6931472
    %v119 = vlog2.pop %v113
    %v120 = vmul.f32 %v119, 0.6931472
    %v121 = vlog2.pop %v116
    %v122 = vmul.f32 %v121, 0.6931472
    %v123 = vlaneseq
    %v124 = vand.u32 %v123, 127
    %125 = vset.pattern.permute.xlu0 0
    %126 = vperm.xlu0 %125, %v85
    %v127 = vpop.permute.xlu0 %126
    %128 = vset.pattern.permute.xlu0 0
    %129 = vperm.xlu0 %128, %v86
    %v130 = vpop.permute.xlu0 %129
    %131 = vset.pattern.permute.xlu0 0
    %132 = vperm.xlu0 %131, %v87
    %v133 = vpop.permute.xlu0 %132
    %vm134 = vcmp.eq.s32.totalorder %v124, %v127
    %vm135 = vcmp.eq.s32.totalorder %v124, %v130
    %vm136 = vcmp.eq.s32.totalorder %v124, %v133
    %v137 = vsel %vm134, %v99, 0.0
    %v138 = vsel %vm135, %v100, 0.0
    %v139 = vsel %vm136, %v101, 0.0
    %v140 = vsel %vm88, %v137, 0.0
    %141 = vadd.xlane.f32.xlu0 %v140
    %v142 = vpop.xlane.xlu0 %141
    %v143 = vsel %vm88, %v138, 0.0
    %144 = vadd.xlane.f32.xlu0 %v143
    %v145 = vpop.xlane.xlu0 %144
    %v146 = vsel %vm95, %v139, 0.0
    %147 = vadd.xlane.f32.xlu0 %v146
    %v148 = vpop.xlane.xlu0 %147
    %v149 = vsel %vm88, %v99, 0.0
    %150 = vadd.xlane.f32.xlu0 %v149
    %v151 = vpop.xlane.xlu0 %150
    %v152 = vsel %vm88, %v100, 0.0
    %153 = vadd.xlane.f32.xlu0 %v152
    %v154 = vpop.xlane.xlu0 %153
    %v155 = vsel %vm95, %v101, 0.0
    %156 = vadd.xlane.f32.xlu0 %v155
    %v157 = vpop.xlane.xlu0 %156
    %v158 = vsub.f32 %v142, %v118
    %v159 = vsub.f32 %v145, %v120
    %v160 = vsub.f32 %v148, %v122
    %v161 = vmul.f32 %v158, -0.8967742
    %v162 = vmul.f32 %v159, -0.8967742
    %v163 = vmul.f32 %v160, -0.8967742
    %v164 = vmul.f32 %v118, 32.0
    %v165 = vmul.f32 %v120, 32.0
    %v166 = vmul.f32 %v122, 32.0
    %v167 = vsub.f32 %v151, %v164
    %v168 = vsub.f32 %v154, %v165
    %v169 = vsub.f32 %v157, %v166
    %v170 = vmul.f32 %v167, 0.0032258064
    %v171 = vmul.f32 %v168, 0.0032258064
    %v172 = vmul.f32 %v169, 0.0032258064
    %v173 = vsub.f32 %v161, %v170
    %v174 = vsub.f32 %v162, %v171
    %v175 = vsub.f32 %v163, %v172
    %s176 = sadd.s32 0, 0
    %s177 = smul.u32 %s176, 20
    %v178 = vlaneseq
    %v179 = vshrl.u32 %v178, 7
    %v180 = vadd.s32 %v179, 8
    %v181 = vadd.s32 %v179, 16
    %v182 = vstv %s177
    %v183 = vadd.s32 %v182, %v179
    %v184 = vadd.s32 %v182, %v180
    %v185 = vadd.s32 %v182, %v181
    %vm186 = vcmp.lt.s32.totalorder %v183, 20
    %vm187 = vcmp.lt.s32.totalorder %v184, 20
    %vm188 = vcmp.lt.s32.totalorder %v185, 20
    %v189 = vsel %vm186, %v173, 0.0
    %v190 = vsel %vm187, %v174, 0.0
    %v191 = vsel %vm188, %v175, 0.0
    %v192 = vld [vmem:[#allocation2] sm:$0x1]
    %vm193 = vcmask 7168
    %v194 = vsel %vm193, %v189, 0.0
    %v195 = vsel %vm193, %v190, 0.0
    %v196 = vadd.f32 %v194, %v195
    %vm197 = vcmask 3072
    %v198 = vsel %vm197, %v191, 0.0
    %v199 = vadd.f32 %v196, %v198
    %200 = vadd.xlane.f32.xlu0 %v199
    %v201 = vpop.xlane.xlu0 %200
    %v202 = vrot.slane %v201, 4
    %v203 = vadd.f32 %v201, %v202
    %v204 = vrot.slane %v203, 2
    %v205 = vadd.f32 %v203, %v204
    %v206 = vrot.slane %v205, 1
    %v207 = vadd.f32 %v205, %v206
    %s208 = vtos %v207
    %v209 = vstv %s208
    %v210 = vadd.f32 %v192, %v209
    %vm211 = vcmask 0
    %212 = vst.msk [vmem:[#allocation2] sm:$0x1] %vm211, %v210
    // Predicated region
    $region14: #{tpu_custom_call.1} parent=1 // pred_check
      %p213 = pneg %p76
    $region15: #{tpu_custom_call.1} parent=1 // pred_check_branch
      %215 = sbr.rel (%p213) target = $region17
    $region16: #{tpu_custom_call.1} parent=1 // pred_region
      %v216 = vld [vmem:[#allocation2] sm:$0x1]
      %v218 = vlaneseq
      %v219 = vshrl.u32 %v218, 7
      %v220 = vsub.s32 0, %v219
      %v221 = vrot.slane %v216, %v220
      %222 = vset.pattern.permute.xlu0 0
      %223 = vperm.xlu0 %222, %v221
      %v224 = vpop.permute.xlu0 %223
      %226 = vst [vmem:[#allocation3] sm:$0xff] %v224
    $region17: #{tpu_custom_call.1} parent=1 // pred_fallthru
      _
    // Predicated region
    $region18: #{tpu_custom_call.1} parent=1 // pred_check
      _
    $region19: #{tpu_custom_call.1} parent=1 // pred_check_branch
      %228 = sbr.rel (0) target = $region21
    $region20: #{tpu_custom_call.1} parent=1 // pred_region
      %s230 = ssub.s32 128, 128
      %231 = vsyncadd [#allocation4], %s230
      %s233 = sshll.u32 [#allocation3], 4
      %s234 = int_to_ptr.vmem [resolvable:$true] %s233
      %236 = dma.vmem_to_hbm [thread:$0]  %s234, 128, %s2, [#allocation4]
    $region21: #{tpu_custom_call.1} parent=1 // pred_fallthru
      _
    // Predicated region
    $region22: #{tpu_custom_call.1} parent=1 // pred_check
      _
    $region23: #{tpu_custom_call.1} parent=1 // pred_check_branch
      %238 = sbr.rel (0) target = $region25
    $region24: #{tpu_custom_call.1} parent=1 // pred_region
      %239 = dma.done [#allocation4], 128
    $region25: #{tpu_custom_call.1} parent=1 // pred_fallthru
      _
    %240 = vsyncpa [#allocation4], 1

</llo_original>
